<compile_context>
chip_gen: v7x
topology: tpu7x:2x2x1
jax: 0.10.0
libtpu: 0.0.40
codegen_flags: <defaults>
</compile_context>

<pallas_src>
import functools
import math

import jax
import jax.numpy as jnp
from jax.experimental import pallas as pl
from jax.experimental.pallas import tpu as pltpu

SQRT2 = math.sqrt(2.0)

# ~4 MiB per block -> with double-buffered input + output, ~16 MiB VMEM.
_TARGET_BLOCK_BYTES = 4 * 1024 * 1024
# Above this total size, force the parallel grid to have >= 2 steps (v7x megacore).
_MEGACORE_SPLIT_BYTES = 2 * 1024 * 1024
# Ragged (non-multiple-of-128) inputs up to this size run as one full block.
_RAGGED_SINGLE_BLOCK_BYTES = 2 * 1024 * 1024
# Explicit scoped-VMEM budget: 16 MiB in flight + 2x headroom; required on v5e
# (16 MiB scoped default), safe on v6e (128 MiB) and v7x (64 MiB physical).
_VMEM_LIMIT_BYTES = 32 * 1024 * 1024


def _scaled_leaky_relu_kernel(x_ref, o_ref, *, negative_slope):
    # Compute in f32 and cast only on the store: exact for f32, and avoids
    # quantizing sqrt(2) / slope*sqrt(2) into narrow storage dtypes.
    x = x_ref[...].astype(jnp.float32)
    y = jnp.where(x >= 0, x * SQRT2, x * (negative_slope * SQRT2))
    o_ref[...] = y.astype(o_ref.dtype)


def _sublane_multiple(itemsize):
    # Whole packed vregs: 8 sublanes for 4-byte, 16 for 2-byte, 32 for 1-byte.
    return {4: 8, 2: 16, 1: 32}.get(itemsize, 8)


def _choose_slab(n_elem, itemsize):
    """Pick (lane, rows) for a zero-copy lane-dense 2-D view, or (None, None)."""
    sublane = _sublane_multiple(itemsize)
    lanes = (4096, 2048, 1024, 512, 256, 128)
    # Preferred: rows is a whole number of packed-vreg sublane groups
    # (no masked rows anywhere).
    for lane in lanes:
        if n_elem % lane == 0:
            rows = n_elem // lane
            if rows > 0 and rows % sublane == 0:
                return lane, rows
    # Relaxed: any multiple of 128.  The grid uses cdiv, so a partial last
    # row-block is masked by Pallas -- still zero-copy, no padding needed.
    for lane in lanes:
        if n_elem % lane == 0 and n_elem // lane > 0:
            return lane, n_elem // lane
    return None, None


def scaled_leaky_relu(x, negative_slope=0.2):
    """Applies ScaledLeakyReLU elementwise to an array of any shape."""
    orig_shape = x.shape
    dtype = x.dtype
    n_elem = x.size
    itemsize = jnp.dtype(dtype).itemsize
    sublane = _sublane_multiple(itemsize)

    kernel = functools.partial(
        _scaled_leaky_relu_kernel, negative_slope=negative_slope
    )
    cost = pl.CostEstimate(
        flops=2 * n_elem,
        transcendentals=0,
        bytes_accessed=2 * n_elem * itemsize,
    )

    def run(x2d, block_rows, grid):
        rows2, lane2 = x2d.shape
        return pl.pallas_call(
            kernel,
            out_shape=jax.ShapeDtypeStruct((rows2, lane2), dtype),
            grid=grid,
            in_specs=[pl.BlockSpec((block_rows, lane2), lambda i: (i, 0))],
            out_specs=pl.BlockSpec((block_rows, lane2), lambda i: (i, 0)),
            compiler_params=pltpu.CompilerParams(
                dimension_semantics=("parallel",),
                vmem_limit_bytes=_VMEM_LIMIT_BYTES,
            ),
            cost_estimate=cost,
        )(x2d)

    lane, rows = _choose_slab(n_elem, itemsize)

    if lane is None:
        # n_elem is not a multiple of 128.
        if n_elem * itemsize <= _RAGGED_SINGLE_BLOCK_BYTES:
            # Small ragged input: one full-array block (block shape == array
            # shape is exempt from the (8,128) rule) -> zero extra HBM passes.
            out2d = run(jnp.reshape(x, (1, n_elem)), block_rows=1, grid=(1,))
            return jnp.reshape(out2d, orig_shape)
        # TODO(synk): large ragged sizes still take a padded slab (two extra
        # HBM passes); replace with a masked tail block if they ever matter.
        lane = 1024
        rows = pl.cdiv(pl.cdiv(n_elem, lane), sublane) * sublane
        x_flat = jnp.pad(jnp.reshape(x, (-1,)), (0, rows * lane - n_elem))
        x2d = jnp.reshape(x_flat, (rows, lane))
        padded = True
    else:
        x2d = jnp.reshape(x, (rows, lane))
        padded = False

    # ~4 MiB blocks, rounded down to a whole number of packed-vreg sublane
    # groups; clamp to the slab so small inputs become a single full block.
    max_rows = max(sublane, _TARGET_BLOCK_BYTES // (lane * itemsize))
    block_rows = min(rows, max_rows)
    # Megacore (v7x): ensure the parallel grid axis has >= 2 steps for tensors
    # above ~2 MiB so both TensorCores get work (no effect on v5e/v6e).
    if rows * lane * itemsize > _MEGACORE_SPLIT_BYTES and rows >= 2 * sublane:
        block_rows = min(block_rows, pl.cdiv(rows, 2))
    block_rows = max(sublane, (block_rows // sublane) * sublane)
    grid = (pl.cdiv(rows, block_rows),)

    out2d = run(x2d, block_rows=block_rows, grid=grid)
    out_flat = jnp.reshape(out2d, (-1,))
    if padded:
        out_flat = out_flat[:n_elem]
    return jnp.reshape(out_flat, orig_shape)


def scaled_leaky_relu_ref(x, negative_slope=0.2):
    return jnp.where(x >= 0, x, x * negative_slope) * SQRT2


if __name__ == "__main__":
    key = jax.random.PRNGKey(0)

    # NCHW feature map, consistent with the conv blocks in the model.
    x = jax.random.normal(key, (2, 4, 16, 16), dtype=jnp.float32)
    out = jax.block_until_ready(scaled_leaky_relu(x, negative_slope=0.2))
    ref = scaled_leaky_relu_ref(x, negative_slope=0.2)
    assert out.shape == x.shape and out.dtype == x.dtype
    assert jnp.allclose(out, ref, atol=1e-6, rtol=1e-5)

    # Ragged size (not a multiple of 128): exercises the single-block path.
    key2 = jax.random.PRNGKey(1)
    y = jax.random.normal(key2, (3, 5, 17, 13), dtype=jnp.float32)
    out_y = jax.block_until_ready(scaled_leaky_relu(y, negative_slope=0.2))
    ref_y = scaled_leaky_relu_ref(y, negative_slope=0.2)
    assert out_y.shape == y.shape and out_y.dtype == y.dtype
    assert jnp.allclose(out_y, ref_y, atol=1e-6, rtol=1e-5)

    # Multiple-of-128 but rows not a multiple of 8: exercises the relaxed
    # zero-copy path with a masked partial last row-block.
    key3 = jax.random.PRNGKey(2)
    z = jax.random.normal(key3, (3, 128), dtype=jnp.float32)
    out_z = jax.block_until_ready(scaled_leaky_relu(z, negative_slope=0.2))
    ref_z = scaled_leaky_relu_ref(z, negative_slope=0.2)
    assert out_z.shape == z.shape and out_z.dtype == z.dtype
    assert jnp.allclose(out_z, ref_z, atol=1e-6, rtol=1e-5)

    print("KERNEL_OK")
</pallas_src>

<mosaic_0001>
module attributes {stable_mosaic.version = 11 : i64} {
  func.func @_scaled_leaky_relu_kernel(%arg0: i32, %arg1: memref<8x256xf32, #tpu.memory_space<vmem>>, %arg2: memref<8x256xf32, #tpu.memory_space<vmem>>) attributes {dimension_semantics = [#tpu.dimension_semantics<parallel>], iteration_bounds = array<i64: 1>, scalar_prefetch = 0 : i64, scratch_operands = 0 : i64, tpu.core_type = #tpu.core_type<tc>, window_params = [{transform_indices = @transform_0, window_bounds = array<i64: 8, 256>}, {transform_indices = @transform_1, window_bounds = array<i64: 8, 256>}]} {
    %c0 = arith.constant 0 : index
    %c0_0 = arith.constant 0 : index
    %0 = vector.load %arg1[%c0, %c0_0] : memref<8x256xf32, #tpu.memory_space<vmem>>, vector<8x256xf32>
    %cst = arith.constant 0.000000e+00 : f32
    %1 = vector.broadcast %cst : f32 to vector<8x256xf32>
    %2 = arith.cmpf oge, %0, %1 : vector<8x256xf32>
    %cst_1 = arith.constant 1.41421354 : f32
    %3 = vector.broadcast %cst_1 : f32 to vector<8x256xf32>
    %4 = arith.mulf %0, %3 : vector<8x256xf32>
    %cst_2 = arith.constant 0.282842726 : f32
    %5 = vector.broadcast %cst_2 : f32 to vector<8x256xf32>
    %6 = arith.mulf %0, %5 : vector<8x256xf32>
    %7 = arith.select %2, %4, %6 : vector<8x256xi1>, vector<8x256xf32>
    %c0_3 = arith.constant 0 : index
    %c0_4 = arith.constant 0 : index
    %8 = vector.load %arg2[%c0_3, %c0_4] : memref<8x256xf32, #tpu.memory_space<vmem>>, vector<8x256xf32>
    tpu.vector_store %arg2[%c0_3, %c0_4], %7 {strides = array<i32>} : memref<8x256xf32, #tpu.memory_space<vmem>>, vector<8x256xf32>,
    return
  }
  func.func @transform_0(%arg0: i32) -> (i32, i32) {
    %c0_i32 = arith.constant 0 : i32
    %c0_i32_0 = arith.constant 0 : i32
    return %arg0, %c0_i32 : i32, i32
  }
  func.func @transform_1(%arg0: i32) -> (i32, i32) {
    %c0_i32 = arith.constant 0 : i32
    %c0_i32_0 = arith.constant 0 : i32
    return %arg0, %c0_i32 : i32, i32
  }
}

</mosaic_0001>

<llo_original>
// kernel: tpu_custom_call.1
$region0: #{tpu_custom_call.1}
  #allocation0 [shape = 'u32[]', space=smem, size = 0x4, offset = 0x4, fixed_abs, tag = 'smem constant byte address 0x4 - core index']
  #allocation1 [shape = 'u32[144,128]{1,0:T(1,128)}', space=vmem, size = 0x12000, scoped, tag = 'internal scratch']
  %s0 = inlined_call_operand.hbm [shape: f32[8,256], index: 0, kind: input, shape index: {}]
  %s1 = inlined_call_operand.hbm [shape: f32[8,256], index: 1, kind: output, shape index: {}]
  %s2 = sld [smem:[#allocation0]]
  $region18: #{tpu_custom_call.1} parent=0
    _
  %s4 = ssub.s32 1, %s2
  %s5 = scalar_select 0, %s4, %s2
  $region1: #{tpu_custom_call.1} parent=0
    #allocation2 [shape = 'u8[8192]{0}', space=vmem, size = 0x2000, scoped, tag = 'input window, operand 0, single buffered']
    #allocation3 [shape = 's32[1]{0}', space=sflag, size = 0x4, scoped, tag = 'scoped memory for tpu_custom_call.1']
    #allocation4 [shape = 's32[1]{0}', space=sflag, size = 0x4, scoped, tag = 'scoped memory for tpu_custom_call.1']
    #allocation5 [shape = 'u8[8192]{0}', space=vmem, size = 0x2000, scoped, tag = 'output window, operand 0, single buffered']
    %6 = vsyncpa [#allocation3], 0
    %7 = vsyncpa [#allocation4], 0
    // Predicated region
    $region2: #{tpu_custom_call.1} parent=1 // pred_check
      _
    $region3: #{tpu_custom_call.1} parent=1 // pred_check_branch
      %9 = sbr.rel (0) target = $region5
    $region4: #{tpu_custom_call.1} parent=1 // pred_region
      %s11 = ssub.s32 256, 256
      %12 = vsyncadd [#allocation3], %s11
      %s14 = sshll.u32 [#allocation2], 4
      %s15 = int_to_ptr.vmem [resolvable:$true] %s14
      %17 = dma.hbm_to_vmem [thread:$0]  %s0, 256, %s15, [#allocation3]
    $region5: #{tpu_custom_call.1} parent=1 // pred_fallthru
      _
    // Predicated region
    $region6: #{tpu_custom_call.1} parent=1 // pred_check
      _
    $region7: #{tpu_custom_call.1} parent=1 // pred_check_branch
      %19 = sbr.rel (0) target = $region9
    $region8: #{tpu_custom_call.1} parent=1 // pred_region
      %20 = dma.done [#allocation3], 256
    $region9: #{tpu_custom_call.1} parent=1 // pred_fallthru
      _
    %v21 = vld [vmem:[#allocation2] sm:$0xff]
    %v22 = vld [vmem:[#allocation2 + $0x8] sm:$0xff]
    %vm23 = vcmp.ge.f32.partialorder %v21, 0.0
    %vm24 = vcmp.ge.f32.partialorder %v22, 0.0
    %v25 = vmul.f32 %v21, 1.4142135
    %v26 = vmul.f32 %v22, 1.4142135
    %v27 = vmul.f32 %v21, 0.28284273
    %v28 = vmul.f32 %v22, 0.28284273
    %v29 = vsel %vm23, %v25, %v27
    %v30 = vsel %vm24, %v26, %v28
    %31 = vst [vmem:[#allocation5] sm:$0xff] %v29
    %32 = vst [vmem:[#allocation5 + $0x8] sm:$0xff] %v30
    // Predicated region
    $region10: #{tpu_custom_call.1} parent=1 // pred_check
      _
    $region11: #{tpu_custom_call.1} parent=1 // pred_check_branch
      %34 = sbr.rel (0) target = $region13
    $region12: #{tpu_custom_call.1} parent=1 // pred_region
      %s36 = ssub.s32 256, 256
      %37 = vsyncadd [#allocation4], %s36
      %s39 = sshll.u32 [#allocation5], 4
      %s40 = int_to_ptr.vmem [resolvable:$true] %s39
      %42 = dma.vmem_to_hbm [thread:$0]  %s40, 256, %s1, [#allocation4]
    $region13: #{tpu_custom_call.1} parent=1 // pred_fallthru
      _
    // Predicated region
    $region14: #{tpu_custom_call.1} parent=1 // pred_check
      _
    $region15: #{tpu_custom_call.1} parent=1 // pred_check_branch
      %44 = sbr.rel (0) target = $region17
    $region16: #{tpu_custom_call.1} parent=1 // pred_region
      %45 = dma.done [#allocation4], 256
    $region17: #{tpu_custom_call.1} parent=1 // pred_fallthru
      _
    %46 = vsyncpa [#allocation3], 1
    %47 = vsyncpa [#allocation4], 1

</llo_original>
